<compile_context>
chip_gen: v7x
topology: tpu7x:2x2x1
jax: 0.10.0
libtpu: 0.0.40
codegen_flags: <defaults>
</compile_context>

<pallas_src>
import functools

import jax
import jax.numpy as jnp
from jax.experimental import pallas as pl
from jax.experimental.pallas import tpu as pltpu


def _round_up(n, m):
    return ((n + m - 1) // m) * m


# --------------------------------------------------------------------------
# Kernel
# --------------------------------------------------------------------------
def _actor_kernel(hidden_size, act_size, max_action, offsets, bias_rows,
                  state_ref, params_ref, out_ref):
    H = hidden_size
    B = state_ref.shape[0]
    obs = state_ref.shape[1]
    # Replicated-bias rows available in the slab (static trace-time choice).
    nb = B if B <= bias_rows else 1

    inp = state_ref[...].astype(jnp.bfloat16)                       # (B, obs)

    # Fused input-branch matmul + fused bias add:
    #   c = inp @ concat([w_in, wi0, wi1, wi2], 1) + concat([b_in, b0, b1, b2], 1)
    # c is (B, 4*H) -- one lane-dense tile when H == 32.
    o = offsets["w_inp"]
    w_inp = params_ref[o:o + obs, :]                                 # (obs, L) bf16
    o = offsets["b_inp"]
    b_inp = params_ref[o:o + bias_rows, :].astype(jnp.float32)       # whole-tile load
    c = (jnp.dot(inp, w_inp, preferred_element_type=jnp.float32)
         + b_inp[:nb, :])                                            # (B, L) f32

    # linear_in + relu
    x = jnp.maximum(c[:, 0:H], 0.0)

    # 3 dense-connection hidden layers (kept unrolled so the LLO scheduler
    # sees the whole dependent MXU chain):
    #   x = relu(Linear(cat([x, inp])))  ==  relu(x @ Wx_k + c_slice_k)
    owx = offsets["wx"]
    for k in range(3):
        wx = params_ref[owx:owx + H, k * H:(k + 1) * H]              # (H, H) bf16
        h = jnp.dot(x.astype(jnp.bfloat16), wx,
                    preferred_element_type=jnp.float32)
        x = jnp.maximum(h + c[:, (k + 1) * H:(k + 2) * H], 0.0)

    # linear_out, tanh, scale by max_action.  w_out/b_out padded lanes are
    # zero, so padded output lanes come out as tanh(0)*max_action = 0 and the
    # store is a full lane-dense (B, 128) vst.
    o = offsets["w_out"]
    w_out = params_ref[o:o + H, :]                                   # (H, L) bf16
    o = offsets["b_out"]
    b_out = params_ref[o:o + bias_rows, :].astype(jnp.float32)
    y = (jnp.dot(x.astype(jnp.bfloat16), w_out,
                 preferred_element_type=jnp.float32) + b_out[:nb, :])
    out_ref[...] = jnp.tanh(y) * max_action


# --------------------------------------------------------------------------
# Parameter packing: 13 arrays -> one lane-packed (rows, lane) bf16 slab
# --------------------------------------------------------------------------
def pack_actor_params(params, obs_size, hidden_size, act_size,
                      dtype=jnp.bfloat16):
    H = hidden_size
    lane = _round_up(max(4 * H, act_size), 128)
    assert 3 * H <= lane and 4 * H <= lane and act_size <= lane
    # bf16 packs 2 rows per 32-bit sublane word -> keep segments 16-row
    # aligned so every in-kernel row slice starts on a packed-tile boundary.
    row_align = 16 if dtype == jnp.bfloat16 else 8

    segs = []
    offsets = {}
    row = 0

    def add(name, arr, replicate_rows=False):
        nonlocal row
        r, c = arr.shape
        offsets[name] = row
        nrows = _round_up(r, row_align)
        pad = jnp.zeros((nrows, lane), jnp.float32)
        if replicate_rows:
            assert r == 1
            pad = pad.at[:, :c].set(
                jnp.broadcast_to(arr.astype(jnp.float32), (nrows, c)))
        else:
            pad = pad.at[:r, :c].set(arr.astype(jnp.float32))
        segs.append(pad)
        row += nrows

    # Fused input-branch weight / bias (linear_in + the "inp" halves of the
    # three dense-connection layers) and lane-packed hidden weights.
    w_inp_all = jnp.concatenate(
        [params["w_in"], params["wi0"], params["wi1"], params["wi2"]], axis=1)
    b_inp_all = jnp.concatenate(
        [params["b_in"], params["b0"], params["b1"], params["b2"]], axis=1)
    wx_pack = jnp.concatenate(
        [params["wx0"], params["wx1"], params["wx2"]], axis=1)       # (H, 3H)

    add("w_inp", w_inp_all)                      # (obs, 4H)
    add("b_inp", b_inp_all, replicate_rows=True)  # replicated (row_align, 4H)
    add("wx", wx_pack)                           # (H, 3H) lane-packed
    add("w_out", params["w_out"])                # (H, act)
    add("b_out", params["b_out"], replicate_rows=True)

    slab = jnp.concatenate(segs, axis=0).astype(dtype)
    meta = {"offsets": offsets, "bias_rows": row_align, "lane": lane}
    return slab, meta


# --------------------------------------------------------------------------
# Wrapper
# --------------------------------------------------------------------------
def actor_forward(state, param_slab, meta, hidden_size, act_size, max_action):
    """state: (B, obs_size) f32. param_slab: packed (rows, lane) bf16 slab."""
    B = state.shape[0]
    lane = meta["lane"]
    kernel = functools.partial(_actor_kernel, hidden_size, act_size,
                               float(max_action), meta["offsets"],
                               meta["bias_rows"])
    vmem = pl.BlockSpec(memory_space=pltpu.MemorySpace.VMEM)
    # No grid: the whole problem (< 50 KiB) sits in VMEM; tiling/gridding a
    # latency-bound tiny problem is pure overhead.  For large-batch rollouts
    # (several hundred rows per step), add a batch grid with
    # dimension_semantics=("parallel",) and a constant index_map for the slab
    # so both v7x TensorCores split the work and the slab stays resident.
    out = pl.pallas_call(
        kernel,
        out_shape=jax.ShapeDtypeStruct((B, lane), jnp.float32),
        in_specs=[vmem, vmem],
        out_specs=vmem,
    )(state, param_slab)
    return out[:, :act_size]


# --------------------------------------------------------------------------
# Init + pure-JAX reference (matches the PyTorch MLP/Actor forward)
# --------------------------------------------------------------------------
def init_actor_params(key, obs_size, act_size, hidden_size):
    """Deterministic init mimicking nn.Linear default (U[-1/sqrt(fan_in), ..])."""
    hidden_aug = hidden_size + obs_size

    def linear(key, fan_in, fan_out):
        kw, kb = jax.random.split(key)
        bound = 1.0 / jnp.sqrt(fan_in)
        w = jax.random.uniform(kw, (fan_in, fan_out), jnp.float32, -bound, bound)
        b = jax.random.uniform(kb, (1, fan_out), jnp.float32, -bound, bound)
        return w, b

    keys = jax.random.split(key, 5)
    params = {}
    params["w_in"], params["b_in"] = linear(keys[0], obs_size, hidden_size)

    for i in range(3):
        w_aug, b = linear(keys[1 + i], hidden_aug, hidden_size)
        # cat([x, inp]) order: first hidden_size rows act on x, rest on inp.
        params[f"wx{i}"] = w_aug[:hidden_size, :]
        params[f"wi{i}"] = w_aug[hidden_size:, :]
        params[f"b{i}"] = b

    params["w_out"], params["b_out"] = linear(keys[4], hidden_size, act_size)
    return params


def actor_forward_ref(state, params, max_action):
    x = jax.nn.relu(state @ params["w_in"] + params["b_in"])
    for i in range(3):
        x = jax.nn.relu(x @ params[f"wx{i}"] + state @ params[f"wi{i}"]
                        + params[f"b{i}"])
    y = x @ params["w_out"] + params["b_out"]
    return jnp.tanh(y) * max_action


# --------------------------------------------------------------------------
if __name__ == "__main__":
    obs_size, act_size, hidden_size = 16, 4, 32
    max_action = 2.0
    batch = 8

    key = jax.random.PRNGKey(0)
    k_params, k_state = jax.random.split(key)
    params = init_actor_params(k_params, obs_size, act_size, hidden_size)
    state = jax.random.normal(k_state, (batch, obs_size), jnp.float32)

    param_slab, meta = pack_actor_params(params, obs_size, hidden_size,
                                         act_size)
    param_slab = jax.block_until_ready(param_slab)

    out = actor_forward(state, param_slab, meta, hidden_size, act_size,
                        max_action)
    out = jax.block_until_ready(out)

    ref = actor_forward_ref(state, params, max_action)
    assert out.shape == (batch, act_size)
    # bf16 MXU operands (f32 accumulation) -> tolerance relaxed vs. f32.
    assert jnp.allclose(out, ref, atol=5e-2, rtol=5e-2), (out, ref)

    print("KERNEL_OK")
</pallas_src>

<mosaic_0001>
module attributes {stable_mosaic.version = 11 : i64} {
  func.func @_actor_kernel(%arg0: memref<8x16xf32, #tpu.memory_space<vmem>>, %arg1: memref<112x128xbf16, #tpu.memory_space<vmem>>, %arg2: memref<8x128xf32, #tpu.memory_space<vmem>>) attributes {dimension_semantics = [], scalar_prefetch = 0 : i64, scratch_operands = 0 : i64, tpu.core_type = #tpu.core_type<tc>} {
    %c0 = arith.constant 0 : index
    %c0_0 = arith.constant 0 : index
    %0 = vector.load %arg0[%c0, %c0_0] : memref<8x16xf32, #tpu.memory_space<vmem>>, vector<8x16xf32>
    %1 = arith.truncf %0 : vector<8x16xf32> to vector<8x16xbf16>
    %c0_1 = arith.constant 0 : index
    %c0_2 = arith.constant 0 : index
    %2 = vector.load %arg1[%c0_1, %c0_2] : memref<112x128xbf16, #tpu.memory_space<vmem>>, vector<16x128xbf16>
    %c16 = arith.constant 16 : index
    %c0_3 = arith.constant 0 : index
    %3 = vector.load %arg1[%c16, %c0_3] : memref<112x128xbf16, #tpu.memory_space<vmem>>, vector<16x128xbf16>
    %4 = arith.extf %3 : vector<16x128xbf16> to vector<16x128xf32>
    %cst = arith.constant dense<0.000000e+00> : vector<8x128xf32>
    %5 = tpu.matmul %1, %2, %cst {dimension_numbers = #tpu.dot_dimension_numbers<[1], [0], [0], [1], [0, 0, 1, 1], [], []>} : vector<8x16xbf16>, vector<16x128xbf16>, vector<8x128xf32> -> vector<8x128xf32>
    %6 = vector.extract_strided_slice %4 {offsets = [0, 0], sizes = [8, 128], strides = [1, 1]} : vector<16x128xf32> to vector<8x128xf32>
    %7 = arith.addf %5, %6 : vector<8x128xf32>
    %8 = vector.extract_strided_slice %7 {offsets = [0, 0], sizes = [8, 32], strides = [1, 1]} : vector<8x128xf32> to vector<8x32xf32>
    %cst_4 = arith.constant 0.000000e+00 : f32
    %9 = vector.broadcast %cst_4 : f32 to vector<8x32xf32>
    %10 = arith.maximumf %8, %9 : vector<8x32xf32>
    %c32 = arith.constant 32 : index
    %c0_5 = arith.constant 0 : index
    %11 = vector.load %arg1[%c32, %c0_5] : memref<112x128xbf16, #tpu.memory_space<vmem>>, vector<32x32xbf16>
    %12 = arith.truncf %10 : vector<8x32xf32> to vector<8x32xbf16>
    %cst_6 = arith.constant dense<0.000000e+00> : vector<8x32xf32>
    %13 = tpu.matmul %12, %11, %cst_6 {dimension_numbers = #tpu.dot_dimension_numbers<[1], [0], [0], [1], [0, 0, 1, 1], [], []>} : vector<8x32xbf16>, vector<32x32xbf16>, vector<8x32xf32> -> vector<8x32xf32>
    %14 = vector.extract_strided_slice %7 {offsets = [0, 32], sizes = [8, 32], strides = [1, 1]} : vector<8x128xf32> to vector<8x32xf32>
    %15 = arith.addf %13, %14 : vector<8x32xf32>
    %cst_7 = arith.constant 0.000000e+00 : f32
    %16 = vector.broadcast %cst_7 : f32 to vector<8x32xf32>
    %17 = arith.maximumf %15, %16 : vector<8x32xf32>
    %c32_8 = arith.constant 32 : index
    %c32_9 = arith.constant 32 : index
    %18 = vector.load %arg1[%c32_8, %c32_9] : memref<112x128xbf16, #tpu.memory_space<vmem>>, vector<32x32xbf16>
    %19 = arith.truncf %17 : vector<8x32xf32> to vector<8x32xbf16>
    %cst_10 = arith.constant dense<0.000000e+00> : vector<8x32xf32>
    %20 = tpu.matmul %19, %18, %cst_10 {dimension_numbers = #tpu.dot_dimension_numbers<[1], [0], [0], [1], [0, 0, 1, 1], [], []>} : vector<8x32xbf16>, vector<32x32xbf16>, vector<8x32xf32> -> vector<8x32xf32>
    %21 = vector.extract_strided_slice %7 {offsets = [0, 64], sizes = [8, 32], strides = [1, 1]} : vector<8x128xf32> to vector<8x32xf32>
    %22 = arith.addf %20, %21 : vector<8x32xf32>
    %cst_11 = arith.constant 0.000000e+00 : f32
    %23 = vector.broadcast %cst_11 : f32 to vector<8x32xf32>
    %24 = arith.maximumf %22, %23 : vector<8x32xf32>
    %c32_12 = arith.constant 32 : index
    %c64 = arith.constant 64 : index
    %25 = vector.load %arg1[%c32_12, %c64] : memref<112x128xbf16, #tpu.memory_space<vmem>>, vector<32x32xbf16>
    %26 = arith.truncf %24 : vector<8x32xf32> to vector<8x32xbf16>
    %cst_13 = arith.constant dense<0.000000e+00> : vector<8x32xf32>
    %27 = tpu.matmul %26, %25, %cst_13 {dimension_numbers = #tpu.dot_dimension_numbers<[1], [0], [0], [1], [0, 0, 1, 1], [], []>} : vector<8x32xbf16>, vector<32x32xbf16>, vector<8x32xf32> -> vector<8x32xf32>
    %28 = vector.extract_strided_slice %7 {offsets = [0, 96], sizes = [8, 32], strides = [1, 1]} : vector<8x128xf32> to vector<8x32xf32>
    %29 = arith.addf %27, %28 : vector<8x32xf32>
    %cst_14 = arith.constant 0.000000e+00 : f32
    %30 = vector.broadcast %cst_14 : f32 to vector<8x32xf32>
    %31 = arith.maximumf %29, %30 : vector<8x32xf32>
    %c64_15 = arith.constant 64 : index
    %c0_16 = arith.constant 0 : index
    %32 = vector.load %arg1[%c64_15, %c0_16] : memref<112x128xbf16, #tpu.memory_space<vmem>>, vector<32x128xbf16>
    %c96 = arith.constant 96 : index
    %c0_17 = arith.constant 0 : index
    %33 = vector.load %arg1[%c96, %c0_17] : memref<112x128xbf16, #tpu.memory_space<vmem>>, vector<16x128xbf16>
    %34 = arith.extf %33 : vector<16x128xbf16> to vector<16x128xf32>
    %35 = arith.truncf %31 : vector<8x32xf32> to vector<8x32xbf16>
    %cst_18 = arith.constant dense<0.000000e+00> : vector<8x128xf32>
    %36 = tpu.matmul %35, %32, %cst_18 {dimension_numbers = #tpu.dot_dimension_numbers<[1], [0], [0], [1], [0, 0, 1, 1], [], []>} : vector<8x32xbf16>, vector<32x128xbf16>, vector<8x128xf32> -> vector<8x128xf32>
    %37 = vector.extract_strided_slice %34 {offsets = [0, 0], sizes = [8, 128], strides = [1, 1]} : vector<16x128xf32> to vector<8x128xf32>
    %38 = arith.addf %36, %37 : vector<8x128xf32>
    %39 = math.tanh %38 : vector<8x128xf32>
    %cst_19 = arith.constant 2.000000e+00 : f32
    %40 = vector.broadcast %cst_19 : f32 to vector<8x128xf32>
    %41 = arith.mulf %39, %40 : vector<8x128xf32>
    %c0_20 = arith.constant 0 : index
    %c0_21 = arith.constant 0 : index
    %42 = vector.load %arg2[%c0_20, %c0_21] : memref<8x128xf32, #tpu.memory_space<vmem>>, vector<8x128xf32>
    tpu.vector_store %arg2[%c0_20, %c0_21], %41 {strides = array<i32>} : memref<8x128xf32, #tpu.memory_space<vmem>>, vector<8x128xf32>,
    return
  }
}

</mosaic_0001>

<llo_original>
// kernel: tpu_custom_call.1
$region0: #{tpu_custom_call.1}
  #allocation0 [shape = 'u32[]', space=smem, size = 0x4, offset = 0x4, fixed_abs, tag = 'smem constant byte address 0x4 - core index']
  #allocation1 [shape = 'u32[144,128]{1,0:T(1,128)}', space=vmem, size = 0x12000, scoped, tag = 'internal scratch']
  %s0 = inlined_call_operand.hbm [shape: f32[8,16], index: 0, kind: input, shape index: {}]
  %s1 = inlined_call_operand.hbm [shape: bf16[112,128], index: 1, kind: input, shape index: {}]
  %s2 = inlined_call_operand.hbm [shape: f32[8,128], index: 2, kind: output, shape index: {}]
  %s3 = sld [smem:[#allocation0]]
  $region26: #{tpu_custom_call.1} parent=0
    _
  %s5 = ssub.s32 1, %s3
  %s6 = scalar_select 0, %s5, %s3
  $region1: #{tpu_custom_call.1} parent=0
    #allocation2 [shape = 'u8[4096]{0}', space=vmem, size = 0x1000, scoped, tag = 'input window, operand 0, single buffered']
    #allocation3 [shape = 's32[1]{0}', space=sflag, size = 0x4, scoped, tag = 'scoped memory for tpu_custom_call.1']
    #allocation4 [shape = 's32[1]{0}', space=sflag, size = 0x4, scoped, tag = 'scoped memory for tpu_custom_call.1']
    #allocation5 [shape = 'u8[28672]{0}', space=vmem, size = 0x7000, scoped, tag = 'input window, operand 1, single buffered']
    #allocation6 [shape = 's32[1]{0}', space=sflag, size = 0x4, scoped, tag = 'scoped memory for tpu_custom_call.1']
    #allocation7 [shape = 'u8[4096]{0}', space=vmem, size = 0x1000, scoped, tag = 'output window, operand 0, single buffered']
    %7 = vsyncpa [#allocation3], 0
    %8 = vsyncpa [#allocation6], 0
    %9 = vsyncpa [#allocation4], 0
    // Predicated region
    $region2: #{tpu_custom_call.1} parent=1 // pred_check
      _
    $region3: #{tpu_custom_call.1} parent=1 // pred_check_branch
      %11 = sbr.rel (0) target = $region5
    $region4: #{tpu_custom_call.1} parent=1 // pred_region
      %s13 = ssub.s32 128, 128
      %14 = vsyncadd [#allocation3], %s13
      %s16 = sshll.u32 [#allocation2], 4
      %s17 = int_to_ptr.vmem [resolvable:$true] %s16
      %19 = dma.hbm_to_vmem [thread:$0]  %s0, 128, %s17, [#allocation3]
    $region5: #{tpu_custom_call.1} parent=1 // pred_fallthru
      _
    // Predicated region
    $region6: #{tpu_custom_call.1} parent=1 // pred_check
      _
    $region7: #{tpu_custom_call.1} parent=1 // pred_check_branch
      %21 = sbr.rel (0) target = $region9
    $region8: #{tpu_custom_call.1} parent=1 // pred_region
      %s23 = ssub.s32 896, 896
      %24 = vsyncadd [#allocation6], %s23
      %s25 = sshll.u32 [#allocation5], 4
      %s26 = int_to_ptr.vmem [resolvable:$true] %s25
      %31 = dma.hbm_to_vmem [thread:$0]  %s1, 896, %s26, [#allocation6], 64, 64, 4
    $region9: #{tpu_custom_call.1} parent=1 // pred_fallthru
      _
    // Predicated region
    $region10: #{tpu_custom_call.1} parent=1 // pred_check
      _
    $region11: #{tpu_custom_call.1} parent=1 // pred_check_branch
      %33 = sbr.rel (0) target = $region13
    $region12: #{tpu_custom_call.1} parent=1 // pred_region
      %34 = dma.done [#allocation3], 128
    $region13: #{tpu_custom_call.1} parent=1 // pred_fallthru
      _
    // Predicated region
    $region14: #{tpu_custom_call.1} parent=1 // pred_check
      _
    $region15: #{tpu_custom_call.1} parent=1 // pred_check_branch
      %36 = sbr.rel (0) target = $region17
    $region16: #{tpu_custom_call.1} parent=1 // pred_region
      %37 = dma.done [#allocation6], 896
    $region17: #{tpu_custom_call.1} parent=1 // pred_fallthru
      _
    %v39 = vld [vmem:[#allocation2] sm:$0xff]
    %v40 = vpack.c.bf16 %v39, %v39
    %v41 = vld [vmem:[#allocation5] sm:$0xf]
    %v42 = vld [vmem:[#allocation5 + $0x4] sm:$0xf]
    %v43 = vld [vmem:[#allocation5 + $0x8] sm:$0xf]
    %v44 = vunpack.c.l.bf16 %v43
    %v47 = vunpack.c.l.b16 %v41
    %v48 = vunpack.c.l.b16 %v42
    %v49 = vpack.c.b16 %v48, %v47
    %vm51 = vcmask 130048
    %v53 = vsel %vm51, %v40, 0
    %55 = vmatprep.subr.bf16.mxu0 0
    %56 = vmatpush1.bf16.msra.mxu0 %v49
    %57 = vmatprep.subr.bf16.mxu0 0
    %58 = vmatpush1.bf16.msra.mxu0 0
    %59 = vmatprep.subr.bf16.mxu0 0
    %60 = vmatpush1.bf16.msra.mxu0 0
    %61 = vmatprep.subr.bf16.mxu0 0
    %62 = vmatpush1.bf16.msra.mxu0 0
    %63 = vmatprep.subr.bf16.mxu0 0
    %64 = vmatpush1.bf16.msra.mxu0 0
    %65 = vmatprep.subr.bf16.mxu0 0
    %66 = vmatpush1.bf16.msra.mxu0 0
    %67 = vmatprep.subr.bf16.mxu0 0
    %68 = vmatpush1.bf16.msra.mxu0 0
    %69 = vmatprep.subr.bf16.mxu0 0
    %70 = vmatpush1.bf16.msra.mxu0 0
    %71 = vmatprep.subr.bf16.mxu0 0
    %72 = vmatpush1.bf16.msra.mxu0 0
    %73 = vmatprep.subr.bf16.mxu0 0
    %74 = vmatpush1.bf16.msra.mxu0 0
    %75 = vmatprep.subr.bf16.mxu0 0
    %76 = vmatpush1.bf16.msra.mxu0 0
    %77 = vmatprep.subr.bf16.mxu0 0
    %78 = vmatpush1.bf16.msra.mxu0 0
    %79 = vmatprep.subr.bf16.mxu0 0
    %80 = vmatpush1.bf16.msra.mxu0 0
    %81 = vmatprep.subr.bf16.mxu0 0
    %82 = vmatpush1.bf16.msra.mxu0 0
    %83 = vmatprep.subr.bf16.mxu0 0
    %84 = vmatpush1.bf16.msra.mxu0 0
    %85 = vmatprep.subr.bf16.mxu0 0
    %86 = vmatpush1.bf16.msra.mxu0 0
    %87 = vmatprep.mubr.bf16.mxu0 0
    %88 = vmatmul.mubr.bf16.gmra.mrb[0].mxu0 %v53
    %v89 = vpop.f32.mrb[0].mxu0
    %v90 = vadd.f32 %v44, %v89
    %v91 = vpop.f32.mrb[0].mxu0
    %v92 = vpop.f32.mrb[0].mxu0
    %v93 = vpop.f32.mrb[0].mxu0
    %94 = vdwg.mxu0
    %v95 = vmax.f32 %v90, 0.0
    %v96 = vld [vmem:[#allocation5 + $0x10] sm:$0xf]
    %v97 = vld [vmem:[#allocation5 + $0x14] sm:$0xf]
    %v98 = vld [vmem:[#allocation5 + $0x18] sm:$0xf]
    %v99 = vld [vmem:[#allocation5 + $0x1c] sm:$0xf]
    %v100 = vpack.c.bf16 %v95, %v95
    %v105 = vunpack.c.l.b16 %v96
    %v106 = vunpack.c.l.b16 %v97
    %v107 = vunpack.c.l.b16 %v98
    %v108 = vunpack.c.l.b16 %v99
    %v109 = vpack.c.b16 %v106, %v105
    %v110 = vpack.c.b16 %v108, %v107
    %114 = vrot.lane.b32.xlu0 %v90, 96
    %v115 = vpop.permute.xlu0 %114
    %vm117 = vcmask 261120
    %v119 = vsel %vm117, %v100, 0
    %121 = vmatprep.subr.bf16.mxu0 0
    %122 = vmatpush1.bf16.msra.mxu0 %v109
    %123 = vmatprep.subr.bf16.mxu0 0
    %124 = vmatpush1.bf16.msra.mxu0 %v110
    %125 = vmatprep.subr.bf16.mxu0 0
    %126 = vmatpush1.bf16.msra.mxu0 0
    %127 = vmatprep.subr.bf16.mxu0 0
    %128 = vmatpush1.bf16.msra.mxu0 0
    %129 = vmatprep.subr.bf16.mxu0 0
    %130 = vmatpush1.bf16.msra.mxu0 0
    %131 = vmatprep.subr.bf16.mxu0 0
    %132 = vmatpush1.bf16.msra.mxu0 0
    %133 = vmatprep.subr.bf16.mxu0 0
    %134 = vmatpush1.bf16.msra.mxu0 0
    %135 = vmatprep.subr.bf16.mxu0 0
    %136 = vmatpush1.bf16.msra.mxu0 0
    %137 = vmatprep.subr.bf16.mxu0 0
    %138 = vmatpush1.bf16.msra.mxu0 0
    %139 = vmatprep.subr.bf16.mxu0 0
    %140 = vmatpush1.bf16.msra.mxu0 0
    %141 = vmatprep.subr.bf16.mxu0 0
    %142 = vmatpush1.bf16.msra.mxu0 0
    %143 = vmatprep.subr.bf16.mxu0 0
    %144 = vmatpush1.bf16.msra.mxu0 0
    %145 = vmatprep.subr.bf16.mxu0 0
    %146 = vmatpush1.bf16.msra.mxu0 0
    %147 = vmatprep.subr.bf16.mxu0 0
    %148 = vmatpush1.bf16.msra.mxu0 0
    %149 = vmatprep.subr.bf16.mxu0 0
    %150 = vmatpush1.bf16.msra.mxu0 0
    %151 = vmatprep.subr.bf16.mxu0 0
    %152 = vmatpush1.bf16.msra.mxu0 0
    %153 = vmatprep.mubr.bf16.mxu0 0
    %154 = vmatmul.mubr.bf16.gmra.mrb[0].mxu0 %v119
    %v155 = vpop.f32.mrb[0].mxu0
    %v156 = vadd.f32 %v115, %v155
    %v157 = vpop.f32.mrb[0].mxu0
    %v158 = vpop.f32.mrb[0].mxu0
    %v159 = vpop.f32.mrb[0].mxu0
    %160 = vdwg.mxu0
    %v161 = vmax.f32 %v156, 0.0
    %v162 = vpack.c.bf16 %v161, %v161
    %163 = vrot.lane.b32.xlu0 %v109, 96
    %v164 = vpop.permute.xlu0 %163
    %165 = vrot.lane.b32.xlu0 %v110, 96
    %v166 = vpop.permute.xlu0 %165
    %169 = vrot.lane.b32.xlu0 %v90, 64
    %v170 = vpop.permute.xlu0 %169
    %v173 = vsel %vm117, %v162, 0
    %175 = vmatprep.subr.bf16.mxu0 0
    %176 = vmatpush1.bf16.msra.mxu0 %v164
    %177 = vmatprep.subr.bf16.mxu0 0
    %178 = vmatpush1.bf16.msra.mxu0 %v166
    %179 = vmatprep.subr.bf16.mxu0 0
    %180 = vmatpush1.bf16.msra.mxu0 0
    %181 = vmatprep.subr.bf16.mxu0 0
    %182 = vmatpush1.bf16.msra.mxu0 0
    %183 = vmatprep.subr.bf16.mxu0 0
    %184 = vmatpush1.bf16.msra.mxu0 0
    %185 = vmatprep.subr.bf16.mxu0 0
    %186 = vmatpush1.bf16.msra.mxu0 0
    %187 = vmatprep.subr.bf16.mxu0 0
    %188 = vmatpush1.bf16.msra.mxu0 0
    %189 = vmatprep.subr.bf16.mxu0 0
    %190 = vmatpush1.bf16.msra.mxu0 0
    %191 = vmatprep.subr.bf16.mxu0 0
    %192 = vmatpush1.bf16.msra.mxu0 0
    %193 = vmatprep.subr.bf16.mxu0 0
    %194 = vmatpush1.bf16.msra.mxu0 0
    %195 = vmatprep.subr.bf16.mxu0 0
    %196 = vmatpush1.bf16.msra.mxu0 0
    %197 = vmatprep.subr.bf16.mxu0 0
    %198 = vmatpush1.bf16.msra.mxu0 0
    %199 = vmatprep.subr.bf16.mxu0 0
    %200 = vmatpush1.bf16.msra.mxu0 0
    %201 = vmatprep.subr.bf16.mxu0 0
    %202 = vmatpush1.bf16.msra.mxu0 0
    %203 = vmatprep.subr.bf16.mxu0 0
    %204 = vmatpush1.bf16.msra.mxu0 0
    %205 = vmatprep.subr.bf16.mxu0 0
    %206 = vmatpush1.bf16.msra.mxu0 0
    %207 = vmatprep.mubr.bf16.mxu0 0
    %208 = vmatmul.mubr.bf16.gmra.mrb[0].mxu0 %v173
    %v209 = vpop.f32.mrb[0].mxu0
    %v210 = vadd.f32 %v170, %v209
    %v211 = vpop.f32.mrb[0].mxu0
    %v212 = vpop.f32.mrb[0].mxu0
    %v213 = vpop.f32.mrb[0].mxu0
    %214 = vdwg.mxu0
    %v215 = vmax.f32 %v210, 0.0
    %v216 = vpack.c.bf16 %v215, %v215
    %217 = vrot.lane.b32.xlu0 %v109, 64
    %v218 = vpop.permute.xlu0 %217
    %219 = vrot.lane.b32.xlu0 %v110, 64
    %v220 = vpop.permute.xlu0 %219
    %223 = vrot.lane.b32.xlu0 %v90, 32
    %v224 = vpop.permute.xlu0 %223
    %v227 = vsel %vm117, %v216, 0
    %229 = vmatprep.subr.bf16.mxu0 0
    %230 = vmatpush1.bf16.msra.mxu0 %v218
    %231 = vmatprep.subr.bf16.mxu0 0
    %232 = vmatpush1.bf16.msra.mxu0 %v220
    %233 = vmatprep.subr.bf16.mxu0 0
    %234 = vmatpush1.bf16.msra.mxu0 0
    %235 = vmatprep.subr.bf16.mxu0 0
    %236 = vmatpush1.bf16.msra.mxu0 0
    %237 = vmatprep.subr.bf16.mxu0 0
    %238 = vmatpush1.bf16.msra.mxu0 0
    %239 = vmatprep.subr.bf16.mxu0 0
    %240 = vmatpush1.bf16.msra.mxu0 0
    %241 = vmatprep.subr.bf16.mxu0 0
    %242 = vmatpush1.bf16.msra.mxu0 0
    %243 = vmatprep.subr.bf16.mxu0 0
    %244 = vmatpush1.bf16.msra.mxu0 0
    %245 = vmatprep.subr.bf16.mxu0 0
    %246 = vmatpush1.bf16.msra.mxu0 0
    %247 = vmatprep.subr.bf16.mxu0 0
    %248 = vmatpush1.bf16.msra.mxu0 0
    %249 = vmatprep.subr.bf16.mxu0 0
    %250 = vmatpush1.bf16.msra.mxu0 0
    %251 = vmatprep.subr.bf16.mxu0 0
    %252 = vmatpush1.bf16.msra.mxu0 0
    %253 = vmatprep.subr.bf16.mxu0 0
    %254 = vmatpush1.bf16.msra.mxu0 0
    %255 = vmatprep.subr.bf16.mxu0 0
    %256 = vmatpush1.bf16.msra.mxu0 0
    %257 = vmatprep.subr.bf16.mxu0 0
    %258 = vmatpush1.bf16.msra.mxu0 0
    %259 = vmatprep.subr.bf16.mxu0 0
    %260 = vmatpush1.bf16.msra.mxu0 0
    %261 = vmatprep.mubr.bf16.mxu0 0
    %262 = vmatmul.mubr.bf16.gmra.mrb[0].mxu0 %v227
    %v263 = vpop.f32.mrb[0].mxu0
    %v264 = vadd.f32 %v224, %v263
    %v265 = vpop.f32.mrb[0].mxu0
    %v266 = vpop.f32.mrb[0].mxu0
    %v267 = vpop.f32.mrb[0].mxu0
    %268 = vdwg.mxu0
    %v269 = vmax.f32 %v264, 0.0
    %v270 = vld [vmem:[#allocation5 + $0x20] sm:$0xf]
    %v271 = vld [vmem:[#allocation5 + $0x24] sm:$0xf]
    %v272 = vld [vmem:[#allocation5 + $0x28] sm:$0xf]
    %v273 = vld [vmem:[#allocation5 + $0x2c] sm:$0xf]
    %v274 = vld [vmem:[#allocation5 + $0x30] sm:$0xf]
    %v275 = vunpack.c.l.bf16 %v274
    %v276 = vpack.c.bf16 %v269, %v269
    %v281 = vunpack.c.l.b16 %v270
    %v282 = vunpack.c.l.b16 %v271
    %v283 = vunpack.c.l.b16 %v272
    %v284 = vunpack.c.l.b16 %v273
    %v285 = vpack.c.b16 %v282, %v281
    %v286 = vpack.c.b16 %v284, %v283
    %v290 = vsel %vm117, %v276, 0
    %292 = vmatprep.subr.bf16.mxu0 0
    %293 = vmatpush1.bf16.msra.mxu0 %v285
    %294 = vmatprep.subr.bf16.mxu0 0
    %295 = vmatpush1.bf16.msra.mxu0 %v286
    %296 = vmatprep.subr.bf16.mxu0 0
    %297 = vmatpush1.bf16.msra.mxu0 0
    %298 = vmatprep.subr.bf16.mxu0 0
    %299 = vmatpush1.bf16.msra.mxu0 0
    %300 = vmatprep.subr.bf16.mxu0 0
    %301 = vmatpush1.bf16.msra.mxu0 0
    %302 = vmatprep.subr.bf16.mxu0 0
    %303 = vmatpush1.bf16.msra.mxu0 0
    %304 = vmatprep.subr.bf16.mxu0 0
    %305 = vmatpush1.bf16.msra.mxu0 0
    %306 = vmatprep.subr.bf16.mxu0 0
    %307 = vmatpush1.bf16.msra.mxu0 0
    %308 = vmatprep.subr.bf16.mxu0 0
    %309 = vmatpush1.bf16.msra.mxu0 0
    %310 = vmatprep.subr.bf16.mxu0 0
    %311 = vmatpush1.bf16.msra.mxu0 0
    %312 = vmatprep.subr.bf16.mxu0 0
    %313 = vmatpush1.bf16.msra.mxu0 0
    %314 = vmatprep.subr.bf16.mxu0 0
    %315 = vmatpush1.bf16.msra.mxu0 0
    %316 = vmatprep.subr.bf16.mxu0 0
    %317 = vmatpush1.bf16.msra.mxu0 0
    %318 = vmatprep.subr.bf16.mxu0 0
    %319 = vmatpush1.bf16.msra.mxu0 0
    %320 = vmatprep.subr.bf16.mxu0 0
    %321 = vmatpush1.bf16.msra.mxu0 0
    %322 = vmatprep.subr.bf16.mxu0 0
    %323 = vmatpush1.bf16.msra.mxu0 0
    %324 = vmatprep.mubr.bf16.mxu0 0
    %325 = vmatmul.mubr.bf16.gmra.mrb[0].mxu0 %v290
    %v326 = vpop.f32.mrb[0].mxu0
    %v327 = vadd.f32 %v275, %v326
    %v328 = vpop.f32.mrb[0].mxu0
    %v329 = vpop.f32.mrb[0].mxu0
    %v330 = vpop.f32.mrb[0].mxu0
    %331 = vdwg.mxu0
    %v332 = vtanh.pop %v327
    %v333 = vmul.f32 %v332, 2.0
    %334 = vst [vmem:[#allocation7] sm:$0xff] %v333
    // Predicated region
    $region18: #{tpu_custom_call.1} parent=1 // pred_check
      _
    $region19: #{tpu_custom_call.1} parent=1 // pred_check_branch
      %336 = sbr.rel (0) target = $region21
    $region20: #{tpu_custom_call.1} parent=1 // pred_region
      %s338 = ssub.s32 128, 128
      %339 = vsyncadd [#allocation4], %s338
      %s341 = sshll.u32 [#allocation7], 4
      %s342 = int_to_ptr.vmem [resolvable:$true] %s341
      %344 = dma.vmem_to_hbm [thread:$0]  %s342, 128, %s2, [#allocation4]
    $region21: #{tpu_custom_call.1} parent=1 // pred_fallthru
      _
    // Predicated region
    $region22: #{tpu_custom_call.1} parent=1 // pred_check
      _
    $region23: #{tpu_custom_call.1} parent=1 // pred_check_branch
      %346 = sbr.rel (0) target = $region25
    $region24: #{tpu_custom_call.1} parent=1 // pred_region
      %347 = dma.done [#allocation4], 128
    $region25: #{tpu_custom_call.1} parent=1 // pred_fallthru
      _
    %348 = vsyncpa [#allocation3], 1
    %349 = vsyncpa [#allocation6], 1
    %350 = vsyncpa [#allocation4], 1

</llo_original>
